<compile_context>
chip_gen: v6e
topology: v6e:2x2x1
jax: 0.10.0
libtpu: 0.0.40
codegen_flags: <defaults>
</compile_context>

<pallas_src>
import functools

import jax
import jax.numpy as jnp
from jax.experimental import pallas as pl
from jax.experimental.pallas import tpu as pltpu


# Maximum tile sizes (clamped for small problems).
_TB = 512    # batch tile           (multiple of 16)
_TN = 512    # out-feature tile     (multiple of 128 -> lane-dense stores)
_TK = 1024   # reduction (K) tile   (multiple of 128)

_LANE = 128
_SUBLANE = 16


def _round_up(x, m):
    return (x + m - 1) // m * m


def _choose_tile(dim, max_tile, align):
    """Return (tile, padded_dim) with align | tile and tile | padded_dim."""
    padded_min = _round_up(dim, align)
    if padded_min <= max_tile:
        return padded_min, padded_min
    return max_tile, _round_up(dim, max_tile)


def _matmul_bias_kernel(x_ref, w_ref, b_ref, o_ref, acc_ref):
    # x_ref: (tb, tk), w_ref: (tk, tn), b_ref: (1, tn) f32, o_ref: (tb, tn)
    k = pl.program_id(3)

    @pl.when(k == 0)
    def _():
        acc_ref[...] = jnp.zeros_like(acc_ref)

    acc_ref[...] += jnp.dot(x_ref[...], w_ref[...],
                            preferred_element_type=jnp.float32)

    @pl.when(k == pl.num_programs(3) - 1)
    def _():
        o_ref[...] = (acc_ref[...] + b_ref[...]).astype(o_ref.dtype)


def _matmul_nobias_kernel(x_ref, w_ref, o_ref, acc_ref):
    k = pl.program_id(3)

    @pl.when(k == 0)
    def _():
        acc_ref[...] = jnp.zeros_like(acc_ref)

    acc_ref[...] += jnp.dot(x_ref[...], w_ref[...],
                            preferred_element_type=jnp.float32)

    @pl.when(k == pl.num_programs(3) - 1)
    def _():
        o_ref[...] = acc_ref[...].astype(o_ref.dtype)


@functools.partial(jax.jit, static_argnames=("use_bias", "compute_dtype"))
def ensemble_linear(x, weight, bias=None, *, use_bias=True,
                    compute_dtype=jnp.bfloat16):
    """Forward of EnsembleLinearLayer: x @ weight (+ bias), per ensemble member."""
    E, B, Din = x.shape
    Ew, Kw, Dout = weight.shape
    assert Ew == E and Kw == Din

    out_dtype = x.dtype

    tb, B_pad = _choose_tile(B, _TB, _SUBLANE)
    tn, N_pad = _choose_tile(Dout, _TN, _LANE)
    tk, K_pad = _choose_tile(Din, _TK, _LANE)

    # Pad to tile-aligned shapes (zeros are exact for the matmul) and cast the
    # two HBM-heavy operands to the MXU-native compute dtype.
    xp = jnp.pad(x, ((0, 0), (0, B_pad - B), (0, K_pad - Din))).astype(compute_dtype)
    wp = jnp.pad(weight, ((0, 0), (0, K_pad - Din), (0, N_pad - Dout))).astype(compute_dtype)

    grid = (E, B_pad // tb, N_pad // tn, K_pad // tk)

    x_spec = pl.BlockSpec((pl.Squeezed(), tb, tk), lambda e, i, j, k: (e, i, k))
    w_spec = pl.BlockSpec((pl.Squeezed(), tk, tn), lambda e, i, j, k: (e, k, j))
    o_spec = pl.BlockSpec((pl.Squeezed(), tb, tn), lambda e, i, j, k: (e, i, j))
    out_shape = jax.ShapeDtypeStruct((E, B_pad, N_pad), out_dtype)

    compiler_params = pltpu.CompilerParams(
        dimension_semantics=("parallel", "parallel", "parallel", "arbitrary"))

    scratch_shapes = [pltpu.VMEM((tb, tn), jnp.float32)]

    if use_bias:
        # Bias stays f32 (added once, in the finalize step); its index_map is
        # independent of k so the block is fetched once per (e, i, j) tile.
        bp = jnp.pad(bias, ((0, 0), (0, 0), (0, N_pad - Dout))).astype(jnp.float32)
        b_spec = pl.BlockSpec((pl.Squeezed(), 1, tn), lambda e, i, j, k: (e, 0, j))
        out = pl.pallas_call(
            _matmul_bias_kernel,
            out_shape=out_shape,
            grid_spec=pltpu.PrefetchScalarGridSpec(
                num_scalar_prefetch=0,
                grid=grid,
                in_specs=[x_spec, w_spec, b_spec],
                out_specs=o_spec,
                scratch_shapes=scratch_shapes),
            compiler_params=compiler_params,
        )(xp, wp, bp)
    else:
        out = pl.pallas_call(
            _matmul_nobias_kernel,
            out_shape=out_shape,
            grid_spec=pltpu.PrefetchScalarGridSpec(
                num_scalar_prefetch=0,
                grid=grid,
                in_specs=[x_spec, w_spec],
                out_specs=o_spec,
                scratch_shapes=scratch_shapes),
            compiler_params=compiler_params,
        )(xp, wp)

    # Strip the padding.
    return out[:, :B, :Dout]


class EnsembleLinearLayer:
    """JAX/Pallas port of the PyTorch EnsembleLinearLayer."""

    def __init__(self, in_size, out_size, use_bias=True, ensemble_num=1, *,
                 key, compute_dtype=jnp.bfloat16):
        self.ensemble_num = ensemble_num
        self.in_size = in_size
        self.out_size = out_size
        self.use_bias = use_bias
        self.compute_dtype = compute_dtype
        kw, kb = jax.random.split(key)
        # torch.rand -> uniform [0, 1).  Parameters kept in f32 "master" form;
        # the wrapper casts to the compute dtype at the pallas_call boundary.
        self.weight = jax.random.uniform(
            kw, (ensemble_num, in_size, out_size), dtype=jnp.float32)
        self.bias = (jax.random.uniform(kb, (ensemble_num, 1, out_size),
                                        dtype=jnp.float32)
                     if use_bias else None)

    def __call__(self, x):
        return ensemble_linear(x, self.weight, self.bias,
                               use_bias=self.use_bias,
                               compute_dtype=self.compute_dtype)


if __name__ == "__main__":
    key = jax.random.PRNGKey(0)
    k_params, k_x = jax.random.split(key)

    ensemble_num, batch, in_size, out_size = 4, 8, 32, 32
    layer = EnsembleLinearLayer(in_size, out_size, use_bias=True,
                                ensemble_num=ensemble_num, key=k_params)

    x = jax.random.normal(k_x, (ensemble_num, batch, in_size), dtype=jnp.float32)

    # Default (bf16 compute, f32 accumulate) path.
    out = jax.block_until_ready(layer(x))
    assert out.shape == (ensemble_num, batch, out_size)
    ref_bf16 = (jnp.matmul(x.astype(jnp.bfloat16).astype(jnp.float32),
                           layer.weight.astype(jnp.bfloat16).astype(jnp.float32))
                + layer.bias)
    assert jnp.allclose(out, ref_bf16, atol=1e-3, rtol=1e-3)

    # Exact f32-compute path (matches the PyTorch module numerics tightly).
    out_f32 = jax.block_until_ready(
        ensemble_linear(x, layer.weight, layer.bias, use_bias=True,
                        compute_dtype=jnp.float32))
    ref_f32 = jnp.matmul(x, layer.weight) + layer.bias
    assert jnp.allclose(out_f32, ref_f32, atol=1e-5, rtol=1e-5)

    # No-bias path.
    out_nb = jax.block_until_ready(
        ensemble_linear(x, layer.weight, use_bias=False,
                        compute_dtype=jnp.float32))
    assert jnp.allclose(out_nb, jnp.matmul(x, layer.weight), atol=1e-5, rtol=1e-5)

    print("KERNEL_OK")
</pallas_src>

<mosaic_0001>
module attributes {stable_mosaic.version = 11 : i64} {
  func.func @_matmul_bias_kernel(%arg0: i32, %arg1: i32, %arg2: i32, %arg3: i32, %arg4: memref<1x16x128xbf16, #tpu.memory_space<vmem>>, %arg5: memref<1x128x128xbf16, #tpu.memory_space<vmem>>, %arg6: memref<1x1x128xf32, #tpu.memory_space<vmem>>, %arg7: memref<1x16x128xf32, #tpu.memory_space<vmem>>, %arg8: memref<16x128xf32, #tpu.memory_space<vmem>>) attributes {dimension_semantics = [#tpu.dimension_semantics<parallel>, #tpu.dimension_semantics<parallel>, #tpu.dimension_semantics<parallel>, #tpu.dimension_semantics<arbitrary>], iteration_bounds = array<i64: 4, 1, 1, 1>, scalar_prefetch = 0 : i64, scratch_operands = 1 : i64, tpu.core_type = #tpu.core_type<tc>, window_params = [{transform_indices = @transform_0, window_bounds = array<i64: 1, 16, 128>}, {transform_indices = @transform_1, window_bounds = array<i64: 1, 128, 128>}, {transform_indices = @transform_2, window_bounds = array<i64: 1, 1, 128>}, {transform_indices = @transform_3, window_bounds = array<i64: 1, 16, 128>}]} {
    %c0_i32 = arith.constant 0 : i32
    %0 = arith.cmpi eq, %arg3, %c0_i32 : i32
    %1 = arith.extui %0 : i1 to i32
    %c0_i32_0 = arith.constant 0 : i32
    %2 = arith.cmpi ne, %1, %c0_i32_0 : i32
    scf.if %2 {
      %cst_12 = arith.constant 0.000000e+00 : f32
      %14 = vector.broadcast %cst_12 : f32 to vector<16x128xf32>
      %c0_13 = arith.constant 0 : index
      %c0_14 = arith.constant 0 : index
      %15 = vector.load %arg8[%c0_13, %c0_14] : memref<16x128xf32, #tpu.memory_space<vmem>>, vector<16x128xf32>
      tpu.vector_store %arg8[%c0_13, %c0_14], %14 {strides = array<i32>} : memref<16x128xf32, #tpu.memory_space<vmem>>, vector<16x128xf32>,
    } else {
    }
    %c0 = arith.constant 0 : index
    %c0_1 = arith.constant 0 : index
    %3 = vector.load %arg8[%c0, %c0_1] : memref<16x128xf32, #tpu.memory_space<vmem>>, vector<16x128xf32>
    %c0_2 = arith.constant 0 : index
    %c0_3 = arith.constant 0 : index
    %c0_4 = arith.constant 0 : index
    %4 = vector.load %arg4[%c0_2, %c0_3, %c0_4] : memref<1x16x128xbf16, #tpu.memory_space<vmem>>, vector<1x16x128xbf16>
    %5 = vector.shape_cast %4 : vector<1x16x128xbf16> to vector<16x128xbf16>
    %c0_5 = arith.constant 0 : index
    %c0_6 = arith.constant 0 : index
    %c0_7 = arith.constant 0 : index
    %6 = vector.load %arg5[%c0_5, %c0_6, %c0_7] : memref<1x128x128xbf16, #tpu.memory_space<vmem>>, vector<1x128x128xbf16>
    %7 = vector.shape_cast %6 : vector<1x128x128xbf16> to vector<128x128xbf16>
    %cst = arith.constant dense<0.000000e+00> : vector<16x128xf32>
    %8 = tpu.matmul %5, %7, %cst {dimension_numbers = #tpu.dot_dimension_numbers<[1], [0], [0], [1], [0, 0, 1, 1], [], []>} : vector<16x128xbf16>, vector<128x128xbf16>, vector<16x128xf32> -> vector<16x128xf32>
    %9 = arith.addf %3, %8 : vector<16x128xf32>
    %c0_8 = arith.constant 0 : index
    %c0_9 = arith.constant 0 : index
    %10 = vector.load %arg8[%c0_8, %c0_9] : memref<16x128xf32, #tpu.memory_space<vmem>>, vector<16x128xf32>
    tpu.vector_store %arg8[%c0_8, %c0_9], %9 {strides = array<i32>} : memref<16x128xf32, #tpu.memory_space<vmem>>, vector<16x128xf32>,
    %c0_i32_10 = arith.constant 0 : i32
    %11 = arith.cmpi eq, %arg3, %c0_i32_10 : i32
    %12 = arith.extui %11 : i1 to i32
    %c0_i32_11 = arith.constant 0 : i32
    %13 = arith.cmpi ne, %12, %c0_i32_11 : i32
    scf.if %13 {
      %c0_12 = arith.constant 0 : index
      %c0_13 = arith.constant 0 : index
      %14 = vector.load %arg8[%c0_12, %c0_13] : memref<16x128xf32, #tpu.memory_space<vmem>>, vector<16x128xf32>
      %c0_14 = arith.constant 0 : index
      %c0_15 = arith.constant 0 : index
      %c0_16 = arith.constant 0 : index
      %15 = vector.load %arg6[%c0_14, %c0_15, %c0_16] : memref<1x1x128xf32, #tpu.memory_space<vmem>>, vector<1x1x128xf32>
      %16 = vector.shape_cast %15 : vector<1x1x128xf32> to vector<1x128xf32>
      %17 = vector.broadcast %16 : vector<1x128xf32> to vector<16x128xf32>
      %18 = arith.addf %14, %17 : vector<16x128xf32>
      %c0_17 = arith.constant 0 : index
      %c0_18 = arith.constant 0 : index
      %c0_19 = arith.constant 0 : index
      %19 = vector.load %arg7[%c0_17, %c0_18, %c0_19] : memref<1x16x128xf32, #tpu.memory_space<vmem>>, vector<1x16x128xf32>
      %20 = vector.shape_cast %19 : vector<1x16x128xf32> to vector<16x128xf32>
      %21 = vector.shape_cast %18 : vector<16x128xf32> to vector<1x16x128xf32>
      tpu.vector_store %arg7[%c0_17, %c0_18, %c0_19], %21 {strides = array<i32>} : memref<1x16x128xf32, #tpu.memory_space<vmem>>, vector<1x16x128xf32>,
    } else {
    }
    return
  }
  func.func @transform_0(%arg0: i32, %arg1: i32, %arg2: i32, %arg3: i32) -> (i32, i32, i32) {
    %c0_i32 = arith.constant 0 : i32
    return %arg0, %arg1, %arg3 : i32, i32, i32
  }
  func.func @transform_1(%arg0: i32, %arg1: i32, %arg2: i32, %arg3: i32) -> (i32, i32, i32) {
    %c0_i32 = arith.constant 0 : i32
    return %arg0, %arg3, %arg2 : i32, i32, i32
  }
  func.func @transform_2(%arg0: i32, %arg1: i32, %arg2: i32, %arg3: i32) -> (i32, i32, i32) {
    %c0_i32 = arith.constant 0 : i32
    %c0_i32_0 = arith.constant 0 : i32
    return %arg0, %c0_i32, %arg2 : i32, i32, i32
  }
  func.func @transform_3(%arg0: i32, %arg1: i32, %arg2: i32, %arg3: i32) -> (i32, i32, i32) {
    %c0_i32 = arith.constant 0 : i32
    return %arg0, %arg1, %arg2 : i32, i32, i32
  }
}

</mosaic_0001>

<llo_original>
// kernel: ensemble_linear.1
$region0: #{ensemble_linear.1}
  #allocation0 [shape = 'u32[]', space=smem, size = 0x4, offset = 0x4, fixed_abs, tag = 'smem constant byte address 0x4 - core index']
  #allocation1 [shape = 'u32[144,128]{1,0:T(1,128)}', space=vmem, size = 0x12000, scoped, tag = 'internal scratch']
  #allocation2 [shape = 'f32[16,128]{1,0:T(8,128)}', space=vmem, size = 0x2000, scoped, tag = 'scratch operand']
  %s0 = inlined_call_operand.vmem [shape: bf16[4,16,128], index: 0, kind: input, shape index: {}]
  %s1 = inlined_call_operand.vmem [shape: bf16[4,128,128], index: 1, kind: input, shape index: {}]
  %s2 = inlined_call_operand.vmem [shape: f32[4,1,128], index: 2, kind: input, shape index: {}]
  %s3 = inlined_call_operand.vmem [shape: f32[4,16,128], index: 3, kind: output, shape index: {}]
  %s4 = sld [smem:[#allocation0]]
  $region53: #{ensemble_linear.1} parent=0
    _
  %s6 = ssub.s32 1, %s4
  %s7 = scalar_select 0, %s6, %s4
  loop: start=0, step=1, limit=6
  $region2: #{ensemble_linear.1} parent=0 // loop_pre_header
    _
  $region3: #{ensemble_linear.1} parent=0 // loop_header
    %s9 = sphi 0, %s13
    %p10 = scmp.ge.s32.totalorder %s9, 6
    %s16 = sphi 0, %s42
    %s17 = sphi 0, %s38
    %s18 = sphi 0, %s34
    %s19 = sphi 0, %s30
    %s20 = sphi 0, %s16
    %s21 = sphi 0, %s17
    %s22 = sphi 0, %s18
    %s23 = sphi 0, %s19
    %s24 = sphi 0, %s20
    %s25 = sphi 0, %s21
    %s26 = sphi 0, %s22
    %s27 = sphi 0, %s23
    %s49 = sphi 0, %s51
    %s52 = sphi 0, %s49
    %s53 = sphi 0, %s52
    %s69 = sphi 0, %s53
    %s79 = sphi 0, %s81
    %s82 = sphi 0, %s79
    %s83 = sphi 0, %s82
    %s99 = sphi 0, %s83
    %s107 = sphi 0, %s109
    %s110 = sphi 0, %s107
    %s111 = sphi 0, %s110
    %s127 = sphi 0, %s111
    %s137 = sphi 0, %s139
    %s140 = sphi 0, %s137
    %s141 = sphi 0, %s140
    %s157 = sphi 0, %s141
  $region4: #{ensemble_linear.1} parent=0 // loop_header_branch
    %12 = sbr.rel (%p10) target = $region8
  $region5: #{ensemble_linear.1} parent=0 // loop_body
    %s14 = ssub.s32 %s9, 1
    %s15 = ssub.s32 %s9, 2
    %s28 = sadd.s32 1, %s19
    %p29 = scmp.ge.s32.totalorder %s28, 1
    %s30 = scalar_select %p29, 0, %s28
    %s31 = sadd.s32 1, %s18
    %s32 = scalar_select %p29, %s31, %s18
    %p33 = scmp.ge.s32.totalorder %s32, 1
    %s34 = scalar_select %p33, 0, %s32
    %s35 = sadd.s32 1, %s17
    %s36 = scalar_select %p33, %s35, %s17
    %p37 = scmp.ge.s32.totalorder %s36, 1
    %s38 = scalar_select %p37, 0, %s36
    %s39 = sadd.s32 1, %s16
    %s40 = scalar_select %p37, %s39, %s16
    %p41 = scmp.ge.s32.totalorder %s40, 4
    %s42 = scalar_select %p41, 0, %s40
    %s43 = ssub.s32 %s16, %s42
    %s44 = ssub.s32 %s17, %s38
    %s45 = sor.u32 %s43, %s44
    %s46 = ssub.s32 %s19, %s30
    %s47 = sor.u32 %s45, %s46
    %p48 = scmp.eq.s32.totalorder %s47, 0
    %s50 = sadd.s32 %s49, 1
    %s51 = scalar_select %p48, %s49, %s50
    %p54 = pneg %p48
    %p55 = scmp.eq.s32.totalorder %s9, 3
    %p56 = por %p54, %p55
    %p57 = scmp.ne.s32.totalorder %s49, %s52
    %p58 = scmp.eq.s32.totalorder %s9, 0
    %p59 = por %p57, %p58
    %p60 = scmp.ne.s32.totalorder %s49, %s52
    %p61 = scmp.eq.s32.totalorder %s14, 3
    %p62 = por %p60, %p61
    %p63 = scmp.ne.s32.totalorder %s52, %s53
    %p64 = scmp.eq.s32.totalorder %s14, 0
    %p65 = por %p63, %p64
    %p66 = scmp.ne.s32.totalorder %s52, %s53
    %p67 = scmp.eq.s32.totalorder %s15, 3
    %p68 = por %p66, %p67
    %p70 = scmp.ne.s32.totalorder %s53, %s69
    %p71 = scmp.eq.s32.totalorder %s15, 0
    %p72 = por %p70, %p71
    %s73 = ssub.s32 %s16, %s42
    %s74 = ssub.s32 %s19, %s30
    %s75 = sor.u32 %s73, %s74
    %s76 = ssub.s32 %s18, %s34
    %s77 = sor.u32 %s75, %s76
    %p78 = scmp.eq.s32.totalorder %s77, 0
    %s80 = sadd.s32 %s79, 1
    %s81 = scalar_select %p78, %s79, %s80
    %p84 = pneg %p78
    %p85 = scmp.eq.s32.totalorder %s9, 3
    %p86 = por %p84, %p85
    %p87 = scmp.ne.s32.totalorder %s79, %s82
    %p88 = scmp.eq.s32.totalorder %s9, 0
    %p89 = por %p87, %p88
    %p90 = scmp.ne.s32.totalorder %s79, %s82
    %p91 = scmp.eq.s32.totalorder %s14, 3
    %p92 = por %p90, %p91
    %p93 = scmp.ne.s32.totalorder %s82, %s83
    %p94 = scmp.eq.s32.totalorder %s14, 0
    %p95 = por %p93, %p94
    %p96 = scmp.ne.s32.totalorder %s82, %s83
    %p97 = scmp.eq.s32.totalorder %s15, 3
    %p98 = por %p96, %p97
    %p100 = scmp.ne.s32.totalorder %s83, %s99
    %p101 = scmp.eq.s32.totalorder %s15, 0
    %p102 = por %p100, %p101
    %s103 = ssub.s32 %s16, %s42
    %s104 = ssub.s32 %s18, %s34
    %s105 = sor.u32 %s103, %s104
    %p106 = scmp.eq.s32.totalorder %s105, 0
    %s108 = sadd.s32 %s107, 1
    %s109 = scalar_select %p106, %s107, %s108
    %p112 = pneg %p106
    %p113 = scmp.eq.s32.totalorder %s9, 3
    %p114 = por %p112, %p113
    %p115 = scmp.ne.s32.totalorder %s107, %s110
    %p116 = scmp.eq.s32.totalorder %s9, 0
    %p117 = por %p115, %p116
    %p118 = scmp.ne.s32.totalorder %s107, %s110
    %p119 = scmp.eq.s32.totalorder %s14, 3
    %p120 = por %p118, %p119
    %p121 = scmp.ne.s32.totalorder %s110, %s111
    %p122 = scmp.eq.s32.totalorder %s14, 0
    %p123 = por %p121, %p122
    %p124 = scmp.ne.s32.totalorder %s110, %s111
    %p125 = scmp.eq.s32.totalorder %s15, 3
    %p126 = por %p124, %p125
    %p128 = scmp.ne.s32.totalorder %s111, %s127
    %p129 = scmp.eq.s32.totalorder %s15, 0
    %p130 = por %p128, %p129
    %s131 = ssub.s32 %s16, %s42
    %s132 = ssub.s32 %s17, %s38
    %s133 = sor.u32 %s131, %s132
    %s134 = ssub.s32 %s18, %s34
    %s135 = sor.u32 %s133, %s134
    %p136 = scmp.eq.s32.totalorder %s135, 0
    %s138 = sadd.s32 %s137, 1
    %s139 = scalar_select %p136, %s137, %s138
    %p142 = pneg %p136
    %p143 = scmp.eq.s32.totalorder %s9, 3
    %p144 = por %p142, %p143
    %p145 = scmp.ne.s32.totalorder %s137, %s140
    %p146 = scmp.eq.s32.totalorder %s9, 0
    %p147 = por %p145, %p146
    %p148 = scmp.ne.s32.totalorder %s137, %s140
    %p149 = scmp.eq.s32.totalorder %s14, 3
    %p150 = por %p148, %p149
    %p151 = scmp.ne.s32.totalorder %s140, %s141
    %p152 = scmp.eq.s32.totalorder %s14, 0
    %p153 = por %p151, %p152
    %p154 = scmp.ne.s32.totalorder %s140, %s141
    %p155 = scmp.eq.s32.totalorder %s15, 3
    %p156 = por %p154, %p155
    %p158 = scmp.ne.s32.totalorder %s141, %s157
    %p159 = scmp.eq.s32.totalorder %s15, 0
    %p160 = por %p158, %p159
    %p161 = scmp.le.s32.totalorder 1, %s9
    %p162 = scmp.lt.s32.totalorder %s9, 5
    %p163 = pnand %p161, %p162
    %p164 = pneg %p163
    // Predicated region
    $region9: #{ensemble_linear.1} parent=5 // pred_check
      _
    $region10: #{ensemble_linear.1} parent=5 // pred_check_branch
      %166 = sbr.rel (%p163) target = $region12
    $region11: #{ensemble_linear.1} parent=5 // pred_region
      %s167 = ssub.s32 %s9, 1
    $region12: #{ensemble_linear.1} parent=5 // pred_fallthru
      _
    %p168 = scmp.lt.s32.totalorder %s9, 4
    // Predicated region
    $region13: #{ensemble_linear.1} parent=5 // pred_check
      %p169 = pneg %p168
    $region14: #{ensemble_linear.1} parent=5 // pred_check_branch
      %171 = sbr.rel (%p169) target = $region16
    $region15: #{ensemble_linear.1} parent=5 // pred_region
      // Predicated region
      $region17: #{ensemble_linear.1} parent=15 // pred_check
        %p172 = pneg %p59
      $region18: #{ensemble_linear.1} parent=15 // pred_check_branch
        %174 = sbr.rel (%p172) target = $region20
      $region19: #{ensemble_linear.1} parent=15 // pred_region
        %s175 = smul.u32 2, %s17
        %p176 = scmp.lt.s32.totalorder %s16, 3
        %s177 = scalar_select %p176, %s16, 3
        %p178 = scmp.lt.s32.totalorder %s175, 1
        %s179 = scalar_select %p178, %s175, 1
        %p180 = scmp.lt.s32.totalorder %s19, 0
        %s181 = scalar_select %p180, %s19, 0
        %s182 = sadd.s32 %s181, %s179
        %s183 = smul.addr %s177, 2
        %s184 = sadd.s32 %s182, %s183
        %s185 = smul.addr %s184, 4
        %s186 = scalar_lea.vmem %s0, %s185
        %s187 = smul.u32 2, %s17
      $region20: #{ensemble_linear.1} parent=15 // pred_fallthru
        _
      // Predicated region
      $region21: #{ensemble_linear.1} parent=15 // pred_check
        %p188 = pneg %p89
      $region22: #{ensemble_linear.1} parent=15 // pred_check_branch
        %190 = sbr.rel (%p188) target = $region24
      $region23: #{ensemble_linear.1} parent=15 // pred_region
        %s191 = smul.u32 16, %s19
        %p192 = scmp.lt.s32.totalorder %s16, 3
        %s193 = scalar_select %p192, %s16, 3
        %p194 = scmp.lt.s32.totalorder %s191, 15
        %s195 = scalar_select %p194, %s191, 15
        %p196 = scmp.lt.s32.totalorder %s18, 0
        %s197 = scalar_select %p196, %s18, 0
        %s198 = sadd.s32 %s197, %s195
        %s199 = smul.addr %s193, 16
        %s200 = sadd.s32 %s198, %s199
        %s201 = smul.addr %s200, 4
        %s202 = scalar_lea.vmem %s1, %s201
        %s203 = smul.u32 16, %s19
      $region24: #{ensemble_linear.1} parent=15 // pred_fallthru
        _
      // Predicated region
      $region25: #{ensemble_linear.1} parent=15 // pred_check
        %p204 = pneg %p117
      $region26: #{ensemble_linear.1} parent=15 // pred_check_branch
        %206 = sbr.rel (%p204) target = $region28
      $region27: #{ensemble_linear.1} parent=15 // pred_region
        %p207 = scmp.lt.s32.totalorder %s16, 3
        %s208 = scalar_select %p207, %s16, 3
        %p209 = scmp.lt.s32.totalorder %s18, 0
        %s210 = scalar_select %p209, %s18, 0
        %s211 = sadd.s32 %s210, %s208
        %s212 = scalar_lea.vmem %s2, %s211
      $region28: #{ensemble_linear.1} parent=15 // pred_fallthru
        _
    $region16: #{ensemble_linear.1} parent=5 // pred_fallthru
      _
    %p213 = scmp.le.s32.totalorder 1, %s9
    %p214 = scmp.lt.s32.totalorder %s9, 5
    %p215 = pnand %p213, %p214
    %p216 = pneg %p215
    // Predicated region
    $region29: #{ensemble_linear.1} parent=5 // pred_check
      _
    $region30: #{ensemble_linear.1} parent=5 // pred_check_branch
      %218 = sbr.rel (%p215) target = $region32
    $region31: #{ensemble_linear.1} parent=5 // pred_region
      %s219 = ssub.s32 %s9, 1
      %s220 = smul.u32 2, %s21
      %p221 = scmp.lt.s32.totalorder %s20, 3
      %s222 = scalar_select %p221, %s20, 3
      %p223 = scmp.lt.s32.totalorder %s220, 1
      %s224 = scalar_select %p223, %s220, 1
      %p225 = scmp.lt.s32.totalorder %s23, 0
      %s226 = scalar_select %p225, %s23, 0
      %s227 = sadd.s32 %s226, %s224
      %s228 = smul.addr %s222, 2
      %s229 = sadd.s32 %s227, %s228
      %s230 = smul.addr %s229, 4
      %s231 = scalar_lea.vmem %s0, %s230
      %p232 = pneg %p65
      %p233 = pneg %p62
      %s234 = smul.u32 16, %s23
      %p235 = scmp.lt.s32.totalorder %s20, 3
      %s236 = scalar_select %p235, %s20, 3
      %p237 = scmp.lt.s32.totalorder %s234, 15
      %s238 = scalar_select %p237, %s234, 15
      %p239 = scmp.lt.s32.totalorder %s22, 0
      %s240 = scalar_select %p239, %s22, 0
      %s241 = sadd.s32 %s240, %s238
      %s242 = smul.addr %s236, 16
      %s243 = sadd.s32 %s241, %s242
      %s244 = smul.addr %s243, 4
      %s245 = scalar_lea.vmem %s1, %s244
      %p246 = pneg %p95
      %p247 = pneg %p92
      %p248 = scmp.lt.s32.totalorder %s20, 3
      %s249 = scalar_select %p248, %s20, 3
      %p250 = scmp.lt.s32.totalorder %s22, 0
      %s251 = scalar_select %p250, %s22, 0
      %s252 = sadd.s32 %s251, %s249
      %s253 = scalar_lea.vmem %s2, %s252
      %p254 = pneg %p123
      %p255 = pneg %p120
      %p256 = pneg %p153
      %p257 = pneg %p150
      %s258 = smul.u32 2, %s21
      %p259 = scmp.lt.s32.totalorder %s20, 3
      %s260 = scalar_select %p259, %s20, 3
      %p261 = scmp.lt.s32.totalorder %s258, 1
      %s262 = scalar_select %p261, %s258, 1
      %p263 = scmp.lt.s32.totalorder %s22, 0
      %s264 = scalar_select %p263, %s22, 0
      %s265 = sadd.s32 %s264, %s262
      %s266 = smul.addr %s260, 2
      %s267 = sadd.s32 %s265, %s266
      %s268 = smul.addr %s267, 8
      %s269 = scalar_lea.vmem %s3, %s268
      %s270 = smul.u32 2, %s21
      %p271 = scmp.lt.s32.totalorder %s20, 3
      %s272 = scalar_select %p271, %s20, 3
      %p273 = scmp.lt.s32.totalorder %s270, 1
      %s274 = scalar_select %p273, %s270, 1
      %p275 = scmp.lt.s32.totalorder %s23, 0
      %s276 = scalar_select %p275, %s23, 0
      %s277 = sadd.s32 %s276, %s274
      %s278 = smul.addr %s272, 2
      %s279 = sadd.s32 %s277, %s278
      %s280 = smul.addr %s279, 4
      %s281 = scalar_lea.vmem %s0, %s280
      %s282 = smul.u32 2, %s21
      %s283 = smul.u32 16, %s23
      %p284 = scmp.lt.s32.totalorder %s20, 3
      %s285 = scalar_select %p284, %s20, 3
      %p286 = scmp.lt.s32.totalorder %s283, 15
      %s287 = scalar_select %p286, %s283, 15
      %p288 = scmp.lt.s32.totalorder %s22, 0
      %s289 = scalar_select %p288, %s22, 0
      %s290 = sadd.s32 %s289, %s287
      %s291 = smul.addr %s285, 16
      %s292 = sadd.s32 %s290, %s291
      %s293 = smul.addr %s292, 4
      %s294 = scalar_lea.vmem %s1, %s293
      %s295 = smul.u32 16, %s23
      %p296 = scmp.lt.s32.totalorder %s20, 3
      %s297 = scalar_select %p296, %s20, 3
      %p298 = scmp.lt.s32.totalorder %s22, 0
      %s299 = scalar_select %p298, %s22, 0
      %s300 = sadd.s32 %s299, %s297
      %s301 = scalar_lea.vmem %s2, %s300
      %s302 = smul.u32 2, %s21
      %p303 = scmp.lt.s32.totalorder %s20, 3
      %s304 = scalar_select %p303, %s20, 3
      %p305 = scmp.lt.s32.totalorder %s302, 1
      %s306 = scalar_select %p305, %s302, 1
      %p307 = scmp.lt.s32.totalorder %s22, 0
      %s308 = scalar_select %p307, %s22, 0
      %s309 = sadd.s32 %s308, %s306
      %s310 = smul.addr %s304, 2
      %s311 = sadd.s32 %s309, %s310
      %s312 = smul.addr %s311, 8
      %s313 = scalar_lea.vmem %s3, %s312
      %s314 = smul.u32 2, %s21
      %p316 = scmp.eq.s32.totalorder %s23, 0
      // Predicated region
      $region33: #{ensemble_linear.1} parent=31 // pred_check
        %p317 = pneg %p316
      $region34: #{ensemble_linear.1} parent=31 // pred_check_branch
        %319 = sbr.rel (%p317) target = $region36
      $region35: #{ensemble_linear.1} parent=31 // pred_region
        %320 = vst [vmem:[#allocation2] sm:$0xff] 0.0
        %321 = vst [vmem:[#allocation2 + $0x8] sm:$0xff] 0.0
      $region36: #{ensemble_linear.1} parent=31 // pred_fallthru
        _
      %v322 = vld [vmem:[#allocation2] sm:$0xff]
      %v323 = vld [vmem:[#allocation2 + $0x8] sm:$0xff]
      %v324 = vld [vmem:[%s281] sm:$0xf]
      %v325 = vld [vmem:[%s281 + $0x4] sm:$0xf]
      %v326 = vld [vmem:[%s294] sm:$0xf]
      %v327 = vld [vmem:[%s294 + $0x4] sm:$0xf]
      %v328 = vld [vmem:[%s294 + $0x8] sm:$0xf]
      %v329 = vld [vmem:[%s294 + $0xc] sm:$0xf]
      %v330 = vld [vmem:[%s294 + $0x10] sm:$0xf]
      %v331 = vld [vmem:[%s294 + $0x14] sm:$0xf]
      %v332 = vld [vmem:[%s294 + $0x18] sm:$0xf]
      %v333 = vld [vmem:[%s294 + $0x1c] sm:$0xf]
      %v334 = vld [vmem:[%s294 + $0x20] sm:$0xf]
      %v335 = vld [vmem:[%s294 + $0x24] sm:$0xf]
      %v336 = vld [vmem:[%s294 + $0x28] sm:$0xf]
      %v337 = vld [vmem:[%s294 + $0x2c] sm:$0xf]
      %v338 = vld [vmem:[%s294 + $0x30] sm:$0xf]
      %v339 = vld [vmem:[%s294 + $0x34] sm:$0xf]
      %v340 = vld [vmem:[%s294 + $0x38] sm:$0xf]
      %v341 = vld [vmem:[%s294 + $0x3c] sm:$0xf]
      %v344 = vunpack.c.l.b16 %v324
      %v345 = vunpack.c.l.b16 %v325
      %v346 = vpack.c.b16 %v345, %v344
      %v364 = vunpack.c.l.b16 %v326
      %v365 = vunpack.c.l.b16 %v327
      %v366 = vunpack.c.l.b16 %v328
      %v367 = vunpack.c.l.b16 %v329
      %v368 = vunpack.c.l.b16 %v330
      %v369 = vunpack.c.l.b16 %v331
      %v370 = vunpack.c.l.b16 %v332
      %v371 = vunpack.c.l.b16 %v333
      %v372 = vunpack.c.l.b16 %v334
      %v373 = vunpack.c.l.b16 %v335
      %v374 = vunpack.c.l.b16 %v336
      %v375 = vunpack.c.l.b16 %v337
      %v376 = vunpack.c.l.b16 %v338
      %v377 = vunpack.c.l.b16 %v339
      %v378 = vunpack.c.l.b16 %v340
      %v379 = vunpack.c.l.b16 %v341
      %v380 = vpack.c.b16 %v365, %v364
      %v381 = vpack.c.b16 %v367, %v366
      %v382 = vpack.c.b16 %v369, %v368
      %v383 = vpack.c.b16 %v371, %v370
      %v384 = vpack.c.b16 %v373, %v372
      %v385 = vpack.c.b16 %v375, %v374
      %v386 = vpack.c.b16 %v377, %v376
      %v387 = vpack.c.b16 %v379, %v378
      %396 = vmatprep.subr.bf16.mxu0 0
      %397 = vmatpush1.bf16.msra.mxu0 %v387
      %398 = vmatprep.subr.bf16.mxu0 0
      %399 = vmatpush1.bf16.msra.mxu0 %v386
      %400 = vmatprep.subr.bf16.mxu0 0
      %401 = vmatpush1.bf16.msra.mxu0 %v385
      %402 = vmatprep.subr.bf16.mxu0 0
      %403 = vmatpush1.bf16.msra.mxu0 %v384
      %404 = vmatprep.subr.bf16.mxu0 0
      %405 = vmatpush1.bf16.msra.mxu0 %v383
      %406 = vmatprep.subr.bf16.mxu0 0
      %407 = vmatpush1.bf16.msra.mxu0 %v382
      %408 = vmatprep.subr.bf16.mxu0 0
      %409 = vmatpush1.bf16.msra.mxu0 %v381
      %410 = vmatprep.subr.bf16.mxu0 0
      %411 = vmatpush1.bf16.msra.mxu0 %v380
      %412 = vmatprep.subr.bf16.mxu0 0
      %413 = vmatpush2.bf16.msra.mxu0 0
      %414 = vmatprep.subr.bf16.mxu0 0
      %415 = vmatpush2.bf16.msra.mxu0 0
      %416 = vmatprep.subr.bf16.mxu0 0
      %417 = vmatpush2.bf16.msra.mxu0 0
      %418 = vmatprep.subr.bf16.mxu0 0
      %419 = vmatpush2.bf16.msra.mxu0 0
      %420 = vmatprep.subr.bf16.mxu0 0
      %421 = vmatpush2.bf16.msra.mxu0 0
      %422 = vmatprep.subr.bf16.mxu0 0
      %423 = vmatpush2.bf16.msra.mxu0 0
      %424 = vmatprep.subr.bf16.mxu0 0
      %425 = vmatpush2.bf16.msra.mxu0 0
      %426 = vmatprep.subr.bf16.mxu0 0
      %427 = vmatpush2.bf16.msra.mxu0 0
      %428 = vmatprep.mubr.bf16.mxu0 0
      %429 = vmatmul.mubr.bf16.gmra.mxu0 %v346
      %v430 = vpop.f32.mrf.mxu0
      %v431 = vadd.f32 0.0, %v430
      %v432 = vpop.f32.mrf.mxu0
      %v433 = vpop.f32.mrf.mxu0
      %v434 = vadd.f32 0.0, %v433
      %v435 = vpop.f32.mrf.mxu0
      %436 = vdwg.mxu0
      %v437 = vadd.f32 %v322, %v431
      %v438 = vadd.f32 %v323, %v434
      %439 = vst [vmem:[#allocation2] sm:$0xff] %v437
      %440 = vst [vmem:[#allocation2 + $0x8] sm:$0xff] %v438
      // Predicated region
      $region37: #{ensemble_linear.1} parent=31 // pred_check
        %p441 = pneg %p316
      $region38: #{ensemble_linear.1} parent=31 // pred_check_branch
        %443 = sbr.rel (%p441) target = $region40
      $region39: #{ensemble_linear.1} parent=31 // pred_region
        %v444 = vld [vmem:[#allocation2] sm:$0xff]
        %v445 = vld [vmem:[#allocation2 + $0x8] sm:$0xff]
        %v446 = vld [vmem:[%s301] sm:$0x1]
        %v448 = vlaneseq
        %v449 = vshrl.u32 %v448, 7
        %v450 = vsub.s32 0, %v449
        %v451 = vrot.slane %v446, %v450
        %v453 = vadd.f32 %v444, %v451
        %v454 = vadd.f32 %v445, %v451
        %455 = vst [vmem:[%s313] sm:$0xff] %v453
        %456 = vst [vmem:[%s313 + $0x8] sm:$0xff] %v454
      $region40: #{ensemble_linear.1} parent=31 // pred_fallthru
        _
      %s457 = smul.u32 2, %s21
      %p458 = scmp.lt.s32.totalorder %s20, 3
      %s459 = scalar_select %p458, %s20, 3
      %p460 = scmp.lt.s32.totalorder %s457, 1
      %s461 = scalar_select %p460, %s457, 1
      %p462 = scmp.lt.s32.totalorder %s22, 0
      %s463 = scalar_select %p462, %s22, 0
      %s464 = sadd.s32 %s463, %s461
      %s465 = smul.addr %s459, 2
      %s466 = sadd.s32 %s464, %s465
      %s467 = smul.addr %s466, 8
      %s468 = scalar_lea.vmem %s3, %s467
      // Predicated region
      $region41: #{ensemble_linear.1} parent=31 // pred_check
        %p469 = pneg %p150
      $region42: #{ensemble_linear.1} parent=31 // pred_check_branch
        %471 = sbr.rel (%p469) target = $region44
      $region43: #{ensemble_linear.1} parent=31 // pred_region
        %s472 = smul.u32 2, %s21
      $region44: #{ensemble_linear.1} parent=31 // pred_fallthru
        _
    $region32: #{ensemble_linear.1} parent=5 // pred_fallthru
      _
    %p473 = scmp.le.s32.totalorder 2, %s9
    // Predicated region
    $region45: #{ensemble_linear.1} parent=5 // pred_check
      %p474 = pneg %p473
    $region46: #{ensemble_linear.1} parent=5 // pred_check_branch
      %476 = sbr.rel (%p474) target = $region48
    $region47: #{ensemble_linear.1} parent=5 // pred_region
      %s477 = ssub.s32 %s9, 2
      // Predicated region
      $region49: #{ensemble_linear.1} parent=47 // pred_check
        %p478 = pneg %p156
      $region50: #{ensemble_linear.1} parent=47 // pred_check_branch
        %480 = sbr.rel (%p478) target = $region52
      $region51: #{ensemble_linear.1} parent=47 // pred_region
        %s481 = smul.u32 2, %s25
        %p482 = scmp.lt.s32.totalorder %s24, 3
        %s483 = scalar_select %p482, %s24, 3
        %p484 = scmp.lt.s32.totalorder %s481, 1
        %s485 = scalar_select %p484, %s481, 1
        %p486 = scmp.lt.s32.totalorder %s26, 0
        %s487 = scalar_select %p486, %s26, 0
        %s488 = sadd.s32 %s487, %s485
        %s489 = smul.addr %s483, 2
        %s490 = sadd.s32 %s488, %s489
        %s491 = smul.addr %s490, 8
        %s492 = scalar_lea.vmem %s3, %s491
      $region52: #{ensemble_linear.1} parent=47 // pred_fallthru
        _
    $region48: #{ensemble_linear.1} parent=5 // pred_fallthru
      _
  $region6: #{ensemble_linear.1} parent=0 // loop_footer
    %s13 = sadd.s32 1, %s9
  $region7: #{ensemble_linear.1} parent=0 // loop_footer_branch
    %8 = sbr.rel target = $region3
  $region8: #{ensemble_linear.1} parent=0 // loop_exit
    _

</llo_original>
